<compile_context>
chip_gen: v7x
topology: tpu7x:2x2x1
jax: 0.10.0
libtpu: 0.0.40
codegen_flags: <defaults>
</compile_context>

<pallas_src>
import jax
import jax.numpy as jnp
from jax.experimental import pallas as pl
from jax.experimental.pallas import tpu as pltpu


def _round_up(n, m):
    return ((n + m - 1) // m) * m


def _make_kernel(tb):
    # Chunk the batch tile so per-chunk intermediates ((chunk, 50) f32 = 32 vregs) stay
    # near vreg capacity; the dot -> bias -> relu -> mul -> sum chain then never
    # round-trips a (tb, 50) buffer through VMEM (review item for v6e/v7x).
    chunk = tb
    for cand in (256, 128):
        if tb % cand == 0:
            chunk = cand
            break
    n_chunks = tb // chunk

    def kernel(x_ref, w1t_ref, b1_ref, w2_ref, b2_ref, o_ref):
        # x_ref  : (tb, 10)  batch-major activation tile, streamed from HBM
        # w1t_ref: (10, 50)  fc1.weight.T    (VMEM resident, constant index_map)
        # b1_ref : (1, 50)   fc1.bias row    (VMEM resident)
        # w2_ref : (1, 50)   fc2.weight row  (VMEM resident)
        # b2_ref : (1, 1)    fc2.bias        (SMEM scalar)
        # o_ref  : (tb, 1)   output column
        w1t = w1t_ref[...]                    # hoisted: 2 vregs, reused by every chunk
        b1 = b1_ref[...]
        w2 = w2_ref[...]
        b2 = b2_ref[0, 0]

        def do_chunk(r0):
            xc = x_ref[pl.ds(r0, chunk), :]                       # (chunk, 10)
            h = jnp.dot(
                xc, w1t,
                preferred_element_type=jnp.float32,
                precision=jax.lax.Precision.HIGHEST,              # ~f32 via multi-pass MXU
            )                                                     # (chunk, 50)
            h = jnp.maximum(h + b1, 0.0)                          # bias + ReLU on the VPU
            # fc2 has N=1: a VPU multiply + cross-lane (XLU) sum beats a 1-wide MXU matmul.
            y = jnp.sum(h * w2, axis=1, keepdims=True)            # (chunk, 1), f32 accum
            o_ref[pl.ds(r0, chunk), :] = (y + b2).astype(o_ref.dtype)

        if n_chunks <= 8:
            for ci in range(n_chunks):        # short static unroll, static slice starts
                do_chunk(ci * chunk)
        else:
            def body(ci, carry):
                do_chunk(pl.multiple_of(ci * chunk, chunk))
                return carry
            jax.lax.fori_loop(0, n_chunks, body, 0)

    return kernel


def _choose_tb(batch, block_b):
    """Pick the batch-tile size: big tiles, >=2 (even) blocks for v7x when batch >= 1024."""
    assert block_b % 128 == 0, "block_b must be a multiple of 128"
    if batch <= block_b:
        if batch < 1024:
            return _round_up(batch, 8)                      # single small block
        # Split into >= 2 aligned blocks so both v7x TensorCores get work.
        return _round_up(pl.cdiv(batch, 2), 128)
    tb = block_b
    nb = pl.cdiv(batch, tb)
    if nb % 2:                                              # prefer an even block count
        tb_even = _round_up(pl.cdiv(batch, nb + 1), 128)
        if pl.cdiv(batch, tb_even) % 2 == 0:
            tb = tb_even
    return tb


def adaptive_nn_forward(x, w1, b1, w2, b2, *, block_b=16384):
    """Forward pass of AdaptiveNN.

    x : (B, 10) float32  batch-major input (PyTorch layout; consumed as-is, no transpose)
    w1: (50, 10) fc1.weight      b1: (50,) fc1.bias
    w2: (1, 50)  fc2.weight      b2: (1,)  fc2.bias
    returns (B, 1) float32

    Keep block_b <= ~16K: the lane-padded (tb,10)/(tb,1) pipeline buffers cost ~2 KiB/row
    of VMEM, so larger tiles would not fit v7x's 64 MiB.
    """
    batch = x.shape[0]
    assert x.shape[1] == 10

    # Tiny parameter re-layouts (<= 2 KiB each; negligible next to x's HBM traffic).
    w1t = w1.T                         # (10, 50)
    b1r = b1.reshape(1, 50)
    w2r = w2.reshape(1, 50)
    b2r = b2.reshape(1, 1)

    tb = _choose_tb(batch, block_b)
    num_blocks = pl.cdiv(batch, tb)
    b_pad = num_blocks * tb
    if b_pad != batch:
        # Ragged tail only: pad the batch-major input once (single producer op).
        # Aligned batches never touch this path.  Rows [batch:b_pad) of the raw output
        # hold relu(b1)@w2 + b2 garbage and are sliced off below.
        x = jnp.pad(x, ((0, b_pad - batch), (0, 0)))

    # Explicit VMEM budget: x / out pipeline buffers are lane-padded to 128 lanes
    # (~512 B/row each, double-buffered) + slack for weights and chunk scratch.
    vmem_limit = min(56 << 20, max(16 << 20, 4 * tb * 512 + (8 << 20)))

    out = pl.pallas_call(
        _make_kernel(tb),
        out_shape=jax.ShapeDtypeStruct((b_pad, 1), jnp.float32),
        grid=(num_blocks,),
        in_specs=[
            pl.BlockSpec((tb, 10), lambda i: (i, 0)),            # x: streamed, double-buffered
            pl.BlockSpec((10, 50), lambda i: (0, 0)),            # fc1.weight.T: resident
            pl.BlockSpec((1, 50), lambda i: (0, 0)),             # fc1.bias:     resident
            pl.BlockSpec((1, 50), lambda i: (0, 0)),             # fc2.weight:   resident
            pl.BlockSpec(memory_space=pltpu.MemorySpace.SMEM),   # fc2.bias:     SMEM scalar
        ],
        out_specs=pl.BlockSpec((tb, 1), lambda i: (i, 0)),
        compiler_params=pltpu.CompilerParams(
            dimension_semantics=("parallel",),                   # shard batch blocks over TCs
            vmem_limit_bytes=vmem_limit,
        ),
    )(x, w1t, b1r, w2r, b2r)

    return out[:batch]


def init_params(key):
    """Deterministic init mimicking nn.Linear's default U(-1/sqrt(fan_in), 1/sqrt(fan_in))."""
    k1, k2, k3, k4 = jax.random.split(key, 4)
    bound1 = 1.0 / jnp.sqrt(10.0)
    bound2 = 1.0 / jnp.sqrt(50.0)
    w1 = jax.random.uniform(k1, (50, 10), jnp.float32, -bound1, bound1)   # fc1.weight
    b1 = jax.random.uniform(k2, (50,), jnp.float32, -bound1, bound1)      # fc1.bias
    w2 = jax.random.uniform(k3, (1, 50), jnp.float32, -bound2, bound2)    # fc2.weight
    b2 = jax.random.uniform(k4, (1,), jnp.float32, -bound2, bound2)       # fc2.bias
    return w1, b1, w2, b2


def _reference(x, w1, b1, w2, b2):
    h = jnp.maximum(
        jnp.dot(x, w1.T, precision=jax.lax.Precision.HIGHEST) + b1[None, :], 0.0)
    return jnp.dot(h, w2.T, precision=jax.lax.Precision.HIGHEST) + b2[None, :]


if __name__ == "__main__":
    key = jax.random.PRNGKey(0)
    kp, kx1, kx2, kx3 = jax.random.split(key, 4)
    w1, b1, w2, b2 = init_params(kp)

    # 1) Small single-block path.
    x1 = jax.random.normal(kx1, (8, 10), jnp.float32)
    o1 = jax.block_until_ready(adaptive_nn_forward(x1, w1, b1, w2, b2))
    r1 = _reference(x1, w1, b1, w2, b2)
    assert o1.shape == (8, 1)
    assert jnp.allclose(o1, r1, atol=1e-5, rtol=1e-5)

    # 2) Multi-block + ragged-tail path (3 blocks of 128; 84 padded rows sliced off).
    x2 = jax.random.normal(kx2, (300, 10), jnp.float32)
    o2 = jax.block_until_ready(adaptive_nn_forward(x2, w1, b1, w2, b2, block_b=128))
    r2 = _reference(x2, w1, b1, w2, b2)
    assert o2.shape == (300, 1)
    assert jnp.allclose(o2, r2, atol=1e-5, rtol=1e-5)

    # 3) >= 2 even blocks (exercises the two-TC split and the chunked inner loop).
    x3 = jax.random.normal(kx3, (2048, 10), jnp.float32)
    o3 = jax.block_until_ready(adaptive_nn_forward(x3, w1, b1, w2, b2))
    r3 = _reference(x3, w1, b1, w2, b2)
    assert o3.shape == (2048, 1)
    assert jnp.allclose(o3, r3, atol=1e-5, rtol=1e-5)

    print("KERNEL_OK")
</pallas_src>

<mosaic_0001>
module attributes {stable_mosaic.version = 11 : i64} {
  func.func @kernel(%arg0: i32, %arg1: memref<8x10xf32, #tpu.memory_space<vmem>>, %arg2: memref<10x50xf32, #tpu.memory_space<vmem>>, %arg3: memref<1x50xf32, #tpu.memory_space<vmem>>, %arg4: memref<1x50xf32, #tpu.memory_space<vmem>>, %arg5: memref<1x1xf32, #tpu.memory_space<smem>>, %arg6: memref<8x1xf32, #tpu.memory_space<vmem>>) attributes {dimension_semantics = [#tpu.dimension_semantics<parallel>], iteration_bounds = array<i64: 1>, scalar_prefetch = 0 : i64, scratch_operands = 0 : i64, tpu.core_type = #tpu.core_type<tc>, window_params = [{transform_indices = @transform_0, window_bounds = array<i64: 8, 10>}, {pipeline_mode = #tpu.pipeline_mode<synchronous>, transform_indices = @transform_1, window_bounds = array<i64: 10, 50>}, {pipeline_mode = #tpu.pipeline_mode<synchronous>, transform_indices = @transform_2, window_bounds = array<i64: 1, 50>}, {pipeline_mode = #tpu.pipeline_mode<synchronous>, transform_indices = @transform_3, window_bounds = array<i64: 1, 50>}, {transform_indices = @transform_4, window_bounds = array<i64: 1, 1>}, {transform_indices = @transform_5, window_bounds = array<i64: 8, 1>}]} {
    %c0 = arith.constant 0 : index
    %c0_0 = arith.constant 0 : index
    %0 = vector.load %arg2[%c0, %c0_0] : memref<10x50xf32, #tpu.memory_space<vmem>>, vector<10x50xf32>
    %c0_1 = arith.constant 0 : index
    %c0_2 = arith.constant 0 : index
    %1 = vector.load %arg3[%c0_1, %c0_2] : memref<1x50xf32, #tpu.memory_space<vmem>>, vector<1x50xf32>
    %c0_3 = arith.constant 0 : index
    %c0_4 = arith.constant 0 : index
    %2 = vector.load %arg4[%c0_3, %c0_4] : memref<1x50xf32, #tpu.memory_space<vmem>>, vector<1x50xf32>
    %c0_5 = arith.constant 0 : index
    %c0_6 = arith.constant 0 : index
    %3 = memref.load %arg5[%c0_5, %c0_6] : memref<1x1xf32, #tpu.memory_space<smem>>
    %c0_7 = arith.constant 0 : index
    %c0_8 = arith.constant 0 : index
    %4 = vector.load %arg1[%c0_7, %c0_8] : memref<8x10xf32, #tpu.memory_space<vmem>>, vector<8x10xf32>
    %cst = arith.constant dense<0.000000e+00> : vector<8x50xf32>
    %5 = tpu.matmul %4, %0, %cst {dimension_numbers = #tpu.dot_dimension_numbers<[1], [0], [0], [1], [0, 0, 1, 1], [], []>, precision = #tpu.contract_precision<fp32>} : vector<8x10xf32>, vector<10x50xf32>, vector<8x50xf32> -> vector<8x50xf32>
    %6 = vector.broadcast %1 : vector<1x50xf32> to vector<8x50xf32>
    %7 = arith.addf %5, %6 : vector<8x50xf32>
    %cst_9 = arith.constant 0.000000e+00 : f32
    %8 = vector.broadcast %cst_9 : f32 to vector<8x50xf32>
    %9 = arith.maximumf %7, %8 : vector<8x50xf32>
    %10 = vector.broadcast %2 : vector<1x50xf32> to vector<8x50xf32>
    %11 = arith.mulf %9, %10 : vector<8x50xf32>
    %cst_10 = arith.constant dense<0.000000e+00> : vector<8xf32>
    %12 = vector.multi_reduction <add>, %11, %cst_10 [1] : vector<8x50xf32> to vector<8xf32>
    %13 = vector.shape_cast %12 : vector<8xf32> to vector<8x1xf32>
    %14 = vector.broadcast %3 : f32 to vector<8x1xf32>
    %15 = arith.addf %13, %14 : vector<8x1xf32>
    %c0_11 = arith.constant 0 : index
    %c0_12 = arith.constant 0 : index
    %16 = vector.load %arg6[%c0_11, %c0_12] : memref<8x1xf32, #tpu.memory_space<vmem>>, vector<8x1xf32>
    tpu.vector_store %arg6[%c0_11, %c0_12], %15 {strides = array<i32>} : memref<8x1xf32, #tpu.memory_space<vmem>>, vector<8x1xf32>,
    return
  }
  func.func @transform_0(%arg0: i32) -> (i32, i32) {
    %c0_i32 = arith.constant 0 : i32
    %c0_i32_0 = arith.constant 0 : i32
    return %arg0, %c0_i32 : i32, i32
  }
  func.func @transform_1(%arg0: i32) -> (i32, i32) {
    %c0_i32 = arith.constant 0 : i32
    %c0_i32_0 = arith.constant 0 : i32
    %c0_i32_1 = arith.constant 0 : i32
    return %c0_i32, %c0_i32_0 : i32, i32
  }
  func.func @transform_2(%arg0: i32) -> (i32, i32) {
    %c0_i32 = arith.constant 0 : i32
    %c0_i32_0 = arith.constant 0 : i32
    %c0_i32_1 = arith.constant 0 : i32
    return %c0_i32, %c0_i32_0 : i32, i32
  }
  func.func @transform_3(%arg0: i32) -> (i32, i32) {
    %c0_i32 = arith.constant 0 : i32
    %c0_i32_0 = arith.constant 0 : i32
    %c0_i32_1 = arith.constant 0 : i32
    return %c0_i32, %c0_i32_0 : i32, i32
  }
  func.func @transform_4(%arg0: i32) -> (i32, i32) {
    %c0_i32 = arith.constant 0 : i32
    %c0_i32_0 = arith.constant 0 : i32
    %c0_i32_1 = arith.constant 0 : i32
    return %c0_i32, %c0_i32_0 : i32, i32
  }
  func.func @transform_5(%arg0: i32) -> (i32, i32) {
    %c0_i32 = arith.constant 0 : i32
    %c0_i32_0 = arith.constant 0 : i32
    return %arg0, %c0_i32 : i32, i32
  }
}

</mosaic_0001>

<llo_original>
// kernel: tpu_custom_call.1
$region0: #{tpu_custom_call.1}
  #allocation0 [shape = 'u32[]', space=smem, size = 0x4, offset = 0x4, fixed_abs, tag = 'smem constant byte address 0x4 - core index']
  #allocation1 [shape = 'u32[144,128]{1,0:T(1,128)}', space=vmem, size = 0x12000, scoped, tag = 'internal scratch']
  #allocation2 [shape = 'f32[1,1]{1,0:T(1,128)S(6)}', space=smem, size = 0x200, scoped, tag = 'scoped memory for tpu_custom_call.1']
  %s0 = inlined_call_operand.hbm [shape: f32[8,10], index: 0, kind: input, shape index: {}]
  %s1 = inlined_call_operand.hbm [shape: f32[10,50], index: 1, kind: input, shape index: {}]
  %s2 = inlined_call_operand.vmem [shape: f32[1,50], index: 2, kind: input, shape index: {}]
  %s3 = inlined_call_operand.vmem [shape: f32[1,50], index: 3, kind: input, shape index: {}]
  %s4 = inlined_call_operand.<no memory space> [shape: f32[1,1], index: 4, kind: input, shape index: {}]
  %s5 = inlined_call_operand.vmem [shape: f32[8,1], index: 5, kind: output, shape index: {}]
  %s6 = sld [smem:[#allocation0]]
  $region38: #{tpu_custom_call.1} parent=0
    _
  %s8 = ssub.s32 1, %s6
  %s9 = scalar_select 0, %s8, %s6
  %10 = sst [smem:[#allocation2]] %s4
  $region1: #{tpu_custom_call.1} parent=0
    #allocation3 [shape = 'u8[4096]{0}', space=vmem, size = 0x1000, scoped, tag = 'input window, operand 0, single buffered']
    #allocation4 [shape = 's32[1]{0}', space=sflag, size = 0x4, scoped, tag = 'scoped memory for tpu_custom_call.1']
    #allocation5 [shape = 'u8[8192]{0}', space=vmem, size = 0x2000, scoped, tag = 'input window, operand 1, single buffered']
    #allocation6 [shape = 's32[1]{0}', space=sflag, size = 0x4, scoped, tag = 'scoped memory for tpu_custom_call.1']
    %11 = vsyncpa [#allocation4], 0
    %12 = vsyncpa [#allocation6], 0
    // Predicated region
    $region2: #{tpu_custom_call.1} parent=1 // pred_check
      _
    $region3: #{tpu_custom_call.1} parent=1 // pred_check_branch
      %14 = sbr.rel (0) target = $region5
    $region4: #{tpu_custom_call.1} parent=1 // pred_region
      %s16 = ssub.s32 128, 128
      %17 = vsyncadd [#allocation4], %s16
      %s19 = sshll.u32 [#allocation3], 4
      %s20 = int_to_ptr.vmem [resolvable:$true] %s19
      %22 = dma.hbm_to_vmem [thread:$0]  %s0, 128, %s20, [#allocation4]
    $region5: #{tpu_custom_call.1} parent=1 // pred_fallthru
      _
    // Predicated region
    $region6: #{tpu_custom_call.1} parent=1 // pred_check
      _
    $region7: #{tpu_custom_call.1} parent=1 // pred_check_branch
      %24 = sbr.rel (0) target = $region9
    $region8: #{tpu_custom_call.1} parent=1 // pred_region
      %s26 = ssub.s32 256, 256
      %27 = vsyncadd [#allocation6], %s26
      %s28 = sshll.u32 [#allocation5], 4
      %s29 = int_to_ptr.vmem [resolvable:$true] %s28
      %34 = dma.hbm_to_vmem [thread:$0]  %s1, 256, %s29, [#allocation6], 128, 128, 8
    $region9: #{tpu_custom_call.1} parent=1 // pred_fallthru
      _
    // Predicated region
    $region10: #{tpu_custom_call.1} parent=1 // pred_check
      _
    $region11: #{tpu_custom_call.1} parent=1 // pred_check_branch
      %36 = sbr.rel (0) target = $region13
    $region12: #{tpu_custom_call.1} parent=1 // pred_region
      _
    $region13: #{tpu_custom_call.1} parent=1 // pred_fallthru
      _
    // Predicated region
    $region14: #{tpu_custom_call.1} parent=1 // pred_check
      _
    $region15: #{tpu_custom_call.1} parent=1 // pred_check_branch
      %38 = sbr.rel (0) target = $region17
    $region16: #{tpu_custom_call.1} parent=1 // pred_region
      _
    $region17: #{tpu_custom_call.1} parent=1 // pred_fallthru
      _
    // Predicated region
    $region18: #{tpu_custom_call.1} parent=1 // pred_check
      _
    $region19: #{tpu_custom_call.1} parent=1 // pred_check_branch
      %40 = sbr.rel (0) target = $region21
    $region20: #{tpu_custom_call.1} parent=1 // pred_region
      _
    $region21: #{tpu_custom_call.1} parent=1 // pred_fallthru
      _
    // Predicated region
    $region22: #{tpu_custom_call.1} parent=1 // pred_check
      _
    $region23: #{tpu_custom_call.1} parent=1 // pred_check_branch
      %42 = sbr.rel (0) target = $region25
    $region24: #{tpu_custom_call.1} parent=1 // pred_region
      %43 = dma.done [#allocation4], 128
    $region25: #{tpu_custom_call.1} parent=1 // pred_fallthru
      _
    // Predicated region
    $region26: #{tpu_custom_call.1} parent=1 // pred_check
      _
    $region27: #{tpu_custom_call.1} parent=1 // pred_check_branch
      %45 = sbr.rel (0) target = $region29
    $region28: #{tpu_custom_call.1} parent=1 // pred_region
      %46 = dma.done [#allocation6], 256
    $region29: #{tpu_custom_call.1} parent=1 // pred_fallthru
      _
    %v47 = vld [vmem:[#allocation5] sm:$0xff]
    %v48 = vld [vmem:[#allocation5 + $0x8] sm:$0x3]
    %v49 = vld [vmem:[%s2] sm:$0x1]
    %v50 = vld [vmem:[%s3] sm:$0x1]
    %s51 = sld [smem:[#allocation2]]
    %v52 = vld [vmem:[#allocation3] sm:$0xff]
    %v54 = vlaneseq
    %v55 = vshrl.u32 %v54, 7
    %v56 = vsub.s32 0, %v55
    %v57 = vrot.slane %v49, %v56
    %vm59 = vcmask 80896
    %v61 = vsel %vm59, %v52, 0
    %vm63 = vcmask 1041408
    %v65 = vsel %vm63, %v48, 0
    %67 = vmatprep.subr.mxu0 0.0
    %v68 = vand.u32 %v47, 4294901760
    %69 = vmatpush1.msra.mxu0 %v68
    %70 = vmatprep.subr.mxu0 0.0
    %v71 = vand.u32 %v65, 4294901760
    %72 = vmatpush1.msra.mxu0 %v71
    %73 = vmatprep.subr.mxu0 0.0
    %74 = vmatpush1.msra.mxu0 0.0
    %75 = vmatprep.subr.mxu0 0.0
    %76 = vmatpush1.msra.mxu0 0.0
    %77 = vmatprep.subr.mxu0 0.0
    %78 = vmatpush1.msra.mxu0 0.0
    %79 = vmatprep.subr.mxu0 0.0
    %80 = vmatpush1.msra.mxu0 0.0
    %81 = vmatprep.subr.mxu0 0.0
    %82 = vmatpush1.msra.mxu0 0.0
    %83 = vmatprep.subr.mxu0 0.0
    %84 = vmatpush1.msra.mxu0 0.0
    %85 = vmatprep.subr.mxu0 0.0
    %86 = vmatpush1.msra.mxu0 0.0
    %87 = vmatprep.subr.mxu0 0.0
    %88 = vmatpush1.msra.mxu0 0.0
    %89 = vmatprep.subr.mxu0 0.0
    %90 = vmatpush1.msra.mxu0 0.0
    %91 = vmatprep.subr.mxu0 0.0
    %92 = vmatpush1.msra.mxu0 0.0
    %93 = vmatprep.subr.mxu0 0.0
    %94 = vmatpush1.msra.mxu0 0.0
    %95 = vmatprep.subr.mxu0 0.0
    %96 = vmatpush1.msra.mxu0 0.0
    %97 = vmatprep.subr.mxu0 0.0
    %98 = vmatpush1.msra.mxu0 0.0
    %99 = vmatprep.subr.mxu0 0.0
    %100 = vmatpush1.msra.mxu0 0.0
    %101 = vmatprep.subr.mxu0 0.0
    %102 = vmatpush1.msra.mxu0 0.0
    %103 = vmatprep.subr.mxu0 0.0
    %104 = vmatpush1.msra.mxu0 0.0
    %105 = vmatprep.subr.mxu0 0.0
    %106 = vmatpush1.msra.mxu0 0.0
    %107 = vmatprep.subr.mxu0 0.0
    %108 = vmatpush1.msra.mxu0 0.0
    %109 = vmatprep.subr.mxu0 0.0
    %110 = vmatpush1.msra.mxu0 0.0
    %111 = vmatprep.subr.mxu0 0.0
    %112 = vmatpush1.msra.mxu0 0.0
    %113 = vmatprep.subr.mxu0 0.0
    %114 = vmatpush1.msra.mxu0 0.0
    %115 = vmatprep.subr.mxu0 0.0
    %116 = vmatpush1.msra.mxu0 0.0
    %117 = vmatprep.subr.mxu0 0.0
    %118 = vmatpush1.msra.mxu0 0.0
    %119 = vmatprep.subr.mxu0 0.0
    %120 = vmatpush1.msra.mxu0 0.0
    %121 = vmatprep.subr.mxu0 0.0
    %122 = vmatpush1.msra.mxu0 0.0
    %123 = vmatprep.subr.mxu0 0.0
    %124 = vmatpush1.msra.mxu0 0.0
    %125 = vmatprep.subr.mxu0 0.0
    %126 = vmatpush1.msra.mxu0 0.0
    %127 = vmatprep.subr.mxu0 0.0
    %128 = vmatpush1.msra.mxu0 0.0
    %129 = vmatprep.subr.mxu0 0.0
    %130 = vmatpush1.msra.mxu0 0.0
    %131 = vmatprep.subr.mxu0 0.0
    %132 = vmatpush1.msra.mxu0 0.0
    %133 = vmatprep.mubr.f32.mxu0 0.0
    %v134 = vand.u32 %v61, 4294901760
    %v135 = vsub.f32 %v61, %v134
    %v136 = vand.u32 %v135, 4294901760
    %v137 = vsub.f32 %v135, %v136
    %v138 = vand.u32 %v137, 4294901760
    %139 = vmatmul.mubr.f32.gmra.mrb[0].mxu0 %v138
    %v140 = vpop.f32.mrb[0].mxu0
    %v141 = vadd.f32 %v57, %v140
    %v142 = vpop.f32.mrb[0].mxu0
    %143 = vdwg.mxu0
    %144 = vmatprep.subr.mxu0 0.0
    %v145 = vand.u32 %v47, 4294901760
    %v146 = vsub.f32 %v47, %v145
    %v147 = vand.u32 %v146, 4294901760
    %v148 = vsub.f32 %v146, %v147
    %v149 = vand.u32 %v148, 4294901760
    %150 = vmatpush1.msra.mxu0 %v149
    %151 = vmatprep.subr.mxu0 0.0
    %v152 = vand.u32 %v65, 4294901760
    %v153 = vsub.f32 %v65, %v152
    %v154 = vand.u32 %v153, 4294901760
    %v155 = vsub.f32 %v153, %v154
    %v156 = vand.u32 %v155, 4294901760
    %157 = vmatpush1.msra.mxu0 %v156
    %158 = vmatprep.subr.mxu0 0.0
    %159 = vmatpush1.msra.mxu0 0.0
    %160 = vmatprep.subr.mxu0 0.0
    %161 = vmatpush1.msra.mxu0 0.0
    %162 = vmatprep.subr.mxu0 0.0
    %163 = vmatpush1.msra.mxu0 0.0
    %164 = vmatprep.subr.mxu0 0.0
    %165 = vmatpush1.msra.mxu0 0.0
    %166 = vmatprep.subr.mxu0 0.0
    %167 = vmatpush1.msra.mxu0 0.0
    %168 = vmatprep.subr.mxu0 0.0
    %169 = vmatpush1.msra.mxu0 0.0
    %170 = vmatprep.subr.mxu0 0.0
    %171 = vmatpush1.msra.mxu0 0.0
    %172 = vmatprep.subr.mxu0 0.0
    %173 = vmatpush1.msra.mxu0 0.0
    %174 = vmatprep.subr.mxu0 0.0
    %175 = vmatpush1.msra.mxu0 0.0
    %176 = vmatprep.subr.mxu0 0.0
    %177 = vmatpush1.msra.mxu0 0.0
    %178 = vmatprep.subr.mxu0 0.0
    %179 = vmatpush1.msra.mxu0 0.0
    %180 = vmatprep.subr.mxu0 0.0
    %181 = vmatpush1.msra.mxu0 0.0
    %182 = vmatprep.subr.mxu0 0.0
    %183 = vmatpush1.msra.mxu0 0.0
    %184 = vmatprep.subr.mxu0 0.0
    %185 = vmatpush1.msra.mxu0 0.0
    %186 = vmatprep.subr.mxu0 0.0
    %187 = vmatpush1.msra.mxu0 0.0
    %188 = vmatprep.subr.mxu0 0.0
    %189 = vmatpush1.msra.mxu0 0.0
    %190 = vmatprep.subr.mxu0 0.0
    %191 = vmatpush1.msra.mxu0 0.0
    %192 = vmatprep.subr.mxu0 0.0
    %193 = vmatpush1.msra.mxu0 0.0
    %194 = vmatprep.subr.mxu0 0.0
    %195 = vmatpush1.msra.mxu0 0.0
    %196 = vmatprep.subr.mxu0 0.0
    %197 = vmatpush1.msra.mxu0 0.0
    %198 = vmatprep.subr.mxu0 0.0
    %199 = vmatpush1.msra.mxu0 0.0
    %200 = vmatprep.subr.mxu0 0.0
    %201 = vmatpush1.msra.mxu0 0.0
    %202 = vmatprep.subr.mxu0 0.0
    %203 = vmatpush1.msra.mxu0 0.0
    %204 = vmatprep.subr.mxu0 0.0
    %205 = vmatpush1.msra.mxu0 0.0
    %206 = vmatprep.subr.mxu0 0.0
    %207 = vmatpush1.msra.mxu0 0.0
    %208 = vmatprep.subr.mxu0 0.0
    %209 = vmatpush1.msra.mxu0 0.0
    %210 = vmatprep.subr.mxu0 0.0
    %211 = vmatpush1.msra.mxu0 0.0
    %212 = vmatprep.subr.mxu0 0.0
    %213 = vmatpush1.msra.mxu0 0.0
    %214 = vmatprep.subr.mxu0 0.0
    %215 = vmatpush1.msra.mxu0 0.0
    %216 = vmatprep.subr.mxu0 0.0
    %217 = vmatpush1.msra.mxu0 0.0
    %218 = vmatprep.mubr.f32.mxu0 0.0
    %v219 = vand.u32 %v61, 4294901760
    %220 = vmatmul.mubr.f32.gmra.mrb[0].mxu0 %v219
    %v221 = vpop.f32.mrb[0].mxu0
    %v222 = vadd.f32 %v141, %v221
    %v223 = vpop.f32.mrb[0].mxu0
    %224 = vdwg.mxu0
    %225 = vmatprep.subr.mxu0 0.0
    %v226 = vand.u32 %v47, 4294901760
    %v227 = vsub.f32 %v47, %v226
    %228 = vmatpush1.msra.mxu0 %v227
    %229 = vmatprep.subr.mxu0 0.0
    %v230 = vand.u32 %v65, 4294901760
    %v231 = vsub.f32 %v65, %v230
    %232 = vmatpush1.msra.mxu0 %v231
    %233 = vmatprep.subr.mxu0 0.0
    %234 = vmatpush1.msra.mxu0 0.0
    %235 = vmatprep.subr.mxu0 0.0
    %236 = vmatpush1.msra.mxu0 0.0
    %237 = vmatprep.subr.mxu0 0.0
    %238 = vmatpush1.msra.mxu0 0.0
    %239 = vmatprep.subr.mxu0 0.0
    %240 = vmatpush1.msra.mxu0 0.0
    %241 = vmatprep.subr.mxu0 0.0
    %242 = vmatpush1.msra.mxu0 0.0
    %243 = vmatprep.subr.mxu0 0.0
    %244 = vmatpush1.msra.mxu0 0.0
    %245 = vmatprep.subr.mxu0 0.0
    %246 = vmatpush1.msra.mxu0 0.0
    %247 = vmatprep.subr.mxu0 0.0
    %248 = vmatpush1.msra.mxu0 0.0
    %249 = vmatprep.subr.mxu0 0.0
    %250 = vmatpush1.msra.mxu0 0.0
    %251 = vmatprep.subr.mxu0 0.0
    %252 = vmatpush1.msra.mxu0 0.0
    %253 = vmatprep.subr.mxu0 0.0
    %254 = vmatpush1.msra.mxu0 0.0
    %255 = vmatprep.subr.mxu0 0.0
    %256 = vmatpush1.msra.mxu0 0.0
    %257 = vmatprep.subr.mxu0 0.0
    %258 = vmatpush1.msra.mxu0 0.0
    %259 = vmatprep.subr.mxu0 0.0
    %260 = vmatpush1.msra.mxu0 0.0
    %261 = vmatprep.subr.mxu0 0.0
    %262 = vmatpush1.msra.mxu0 0.0
    %263 = vmatprep.subr.mxu0 0.0
    %264 = vmatpush1.msra.mxu0 0.0
    %265 = vmatprep.subr.mxu0 0.0
    %266 = vmatpush1.msra.mxu0 0.0
    %267 = vmatprep.subr.mxu0 0.0
    %268 = vmatpush1.msra.mxu0 0.0
    %269 = vmatprep.subr.mxu0 0.0
    %270 = vmatpush1.msra.mxu0 0.0
    %271 = vmatprep.subr.mxu0 0.0
    %272 = vmatpush1.msra.mxu0 0.0
    %273 = vmatprep.subr.mxu0 0.0
    %274 = vmatpush1.msra.mxu0 0.0
    %275 = vmatprep.subr.mxu0 0.0
    %276 = vmatpush1.msra.mxu0 0.0
    %277 = vmatprep.subr.mxu0 0.0
    %278 = vmatpush1.msra.mxu0 0.0
    %279 = vmatprep.subr.mxu0 0.0
    %280 = vmatpush1.msra.mxu0 0.0
    %281 = vmatprep.subr.mxu0 0.0
    %282 = vmatpush1.msra.mxu0 0.0
    %283 = vmatprep.subr.mxu0 0.0
    %284 = vmatpush1.msra.mxu0 0.0
    %285 = vmatprep.subr.mxu0 0.0
    %286 = vmatpush1.msra.mxu0 0.0
    %287 = vmatprep.subr.mxu0 0.0
    %288 = vmatpush1.msra.mxu0 0.0
    %289 = vmatprep.subr.mxu0 0.0
    %290 = vmatpush1.msra.mxu0 0.0
    %291 = vmatprep.subr.mxu0 0.0
    %292 = vmatpush1.msra.mxu0 0.0
    %293 = vmatprep.mubr.f32.mxu0 0.0
    %v294 = vand.u32 %v61, 4294901760
    %v295 = vsub.f32 %v61, %v294
    %296 = vmatmul.mubr.f32.gmra.mrb[0].mxu0 %v295
    %v297 = vpop.f32.mrb[0].mxu0
    %v298 = vadd.f32 %v222, %v297
    %v299 = vpop.f32.mrb[0].mxu0
    %300 = vdwg.mxu0
    %301 = vmatprep.subr.mxu0 0.0
    %v302 = vand.u32 %v47, 4294901760
    %303 = vmatpush1.msra.mxu0 %v302
    %304 = vmatprep.subr.mxu0 0.0
    %v305 = vand.u32 %v65, 4294901760
    %306 = vmatpush1.msra.mxu0 %v305
    %307 = vmatprep.subr.mxu0 0.0
    %308 = vmatpush1.msra.mxu0 0.0
    %309 = vmatprep.subr.mxu0 0.0
    %310 = vmatpush1.msra.mxu0 0.0
    %311 = vmatprep.subr.mxu0 0.0
    %312 = vmatpush1.msra.mxu0 0.0
    %313 = vmatprep.subr.mxu0 0.0
    %314 = vmatpush1.msra.mxu0 0.0
    %315 = vmatprep.subr.mxu0 0.0
    %316 = vmatpush1.msra.mxu0 0.0
    %317 = vmatprep.subr.mxu0 0.0
    %318 = vmatpush1.msra.mxu0 0.0
    %319 = vmatprep.subr.mxu0 0.0
    %320 = vmatpush1.msra.mxu0 0.0
    %321 = vmatprep.subr.mxu0 0.0
    %322 = vmatpush1.msra.mxu0 0.0
    %323 = vmatprep.subr.mxu0 0.0
    %324 = vmatpush1.msra.mxu0 0.0
    %325 = vmatprep.subr.mxu0 0.0
    %326 = vmatpush1.msra.mxu0 0.0
    %327 = vmatprep.subr.mxu0 0.0
    %328 = vmatpush1.msra.mxu0 0.0
    %329 = vmatprep.subr.mxu0 0.0
    %330 = vmatpush1.msra.mxu0 0.0
    %331 = vmatprep.subr.mxu0 0.0
    %332 = vmatpush1.msra.mxu0 0.0
    %333 = vmatprep.subr.mxu0 0.0
    %334 = vmatpush1.msra.mxu0 0.0
    %335 = vmatprep.subr.mxu0 0.0
    %336 = vmatpush1.msra.mxu0 0.0
    %337 = vmatprep.subr.mxu0 0.0
    %338 = vmatpush1.msra.mxu0 0.0
    %339 = vmatprep.subr.mxu0 0.0
    %340 = vmatpush1.msra.mxu0 0.0
    %341 = vmatprep.subr.mxu0 0.0
    %342 = vmatpush1.msra.mxu0 0.0
    %343 = vmatprep.subr.mxu0 0.0
    %344 = vmatpush1.msra.mxu0 0.0
    %345 = vmatprep.subr.mxu0 0.0
    %346 = vmatpush1.msra.mxu0 0.0
    %347 = vmatprep.subr.mxu0 0.0
    %348 = vmatpush1.msra.mxu0 0.0
    %349 = vmatprep.subr.mxu0 0.0
    %350 = vmatpush1.msra.mxu0 0.0
    %351 = vmatprep.subr.mxu0 0.0
    %352 = vmatpush1.msra.mxu0 0.0
    %353 = vmatprep.subr.mxu0 0.0
    %354 = vmatpush1.msra.mxu0 0.0
    %355 = vmatprep.subr.mxu0 0.0
    %356 = vmatpush1.msra.mxu0 0.0
    %357 = vmatprep.subr.mxu0 0.0
    %358 = vmatpush1.msra.mxu0 0.0
    %359 = vmatprep.subr.mxu0 0.0
    %360 = vmatpush1.msra.mxu0 0.0
    %361 = vmatprep.subr.mxu0 0.0
    %362 = vmatpush1.msra.mxu0 0.0
    %363 = vmatprep.subr.mxu0 0.0
    %364 = vmatpush1.msra.mxu0 0.0
    %365 = vmatprep.subr.mxu0 0.0
    %366 = vmatpush1.msra.mxu0 0.0
    %367 = vmatprep.mubr.f32.mxu0 0.0
    %v368 = vand.u32 %v61, 4294901760
    %v369 = vsub.f32 %v61, %v368
    %v370 = vand.u32 %v369, 4294901760
    %371 = vmatmul.mubr.f32.gmra.mrb[0].mxu0 %v370
    %v372 = vpop.f32.mrb[0].mxu0
    %v373 = vadd.f32 %v298, %v372
    %v374 = vpop.f32.mrb[0].mxu0
    %375 = vdwg.mxu0
    %376 = vmatprep.subr.mxu0 0.0
    %v377 = vand.u32 %v47, 4294901760
    %v378 = vsub.f32 %v47, %v377
    %v379 = vand.u32 %v378, 4294901760
    %380 = vmatpush1.msra.mxu0 %v379
    %381 = vmatprep.subr.mxu0 0.0
    %v382 = vand.u32 %v65, 4294901760
    %v383 = vsub.f32 %v65, %v382
    %v384 = vand.u32 %v383, 4294901760
    %385 = vmatpush1.msra.mxu0 %v384
    %386 = vmatprep.subr.mxu0 0.0
    %387 = vmatpush1.msra.mxu0 0.0
    %388 = vmatprep.subr.mxu0 0.0
    %389 = vmatpush1.msra.mxu0 0.0
    %390 = vmatprep.subr.mxu0 0.0
    %391 = vmatpush1.msra.mxu0 0.0
    %392 = vmatprep.subr.mxu0 0.0
    %393 = vmatpush1.msra.mxu0 0.0
    %394 = vmatprep.subr.mxu0 0.0
    %395 = vmatpush1.msra.mxu0 0.0
    %396 = vmatprep.subr.mxu0 0.0
    %397 = vmatpush1.msra.mxu0 0.0
    %398 = vmatprep.subr.mxu0 0.0
    %399 = vmatpush1.msra.mxu0 0.0
    %400 = vmatprep.subr.mxu0 0.0
    %401 = vmatpush1.msra.mxu0 0.0
    %402 = vmatprep.subr.mxu0 0.0
    %403 = vmatpush1.msra.mxu0 0.0
    %404 = vmatprep.subr.mxu0 0.0
    %405 = vmatpush1.msra.mxu0 0.0
    %406 = vmatprep.subr.mxu0 0.0
    %407 = vmatpush1.msra.mxu0 0.0
    %408 = vmatprep.subr.mxu0 0.0
    %409 = vmatpush1.msra.mxu0 0.0
    %410 = vmatprep.subr.mxu0 0.0
    %411 = vmatpush1.msra.mxu0 0.0
    %412 = vmatprep.subr.mxu0 0.0
    %413 = vmatpush1.msra.mxu0 0.0
    %414 = vmatprep.subr.mxu0 0.0
    %415 = vmatpush1.msra.mxu0 0.0
    %416 = vmatprep.subr.mxu0 0.0
    %417 = vmatpush1.msra.mxu0 0.0
    %418 = vmatprep.subr.mxu0 0.0
    %419 = vmatpush1.msra.mxu0 0.0
    %420 = vmatprep.subr.mxu0 0.0
    %421 = vmatpush1.msra.mxu0 0.0
    %422 = vmatprep.subr.mxu0 0.0
    %423 = vmatpush1.msra.mxu0 0.0
    %424 = vmatprep.subr.mxu0 0.0
    %425 = vmatpush1.msra.mxu0 0.0
    %426 = vmatprep.subr.mxu0 0.0
    %427 = vmatpush1.msra.mxu0 0.0
    %428 = vmatprep.subr.mxu0 0.0
    %429 = vmatpush1.msra.mxu0 0.0
    %430 = vmatprep.subr.mxu0 0.0
    %431 = vmatpush1.msra.mxu0 0.0
    %432 = vmatprep.subr.mxu0 0.0
    %433 = vmatpush1.msra.mxu0 0.0
    %434 = vmatprep.subr.mxu0 0.0
    %435 = vmatpush1.msra.mxu0 0.0
    %436 = vmatprep.subr.mxu0 0.0
    %437 = vmatpush1.msra.mxu0 0.0
    %438 = vmatprep.subr.mxu0 0.0
    %439 = vmatpush1.msra.mxu0 0.0
    %440 = vmatprep.subr.mxu0 0.0
    %441 = vmatpush1.msra.mxu0 0.0
    %442 = vmatprep.subr.mxu0 0.0
    %443 = vmatpush1.msra.mxu0 0.0
    %444 = vmatprep.subr.mxu0 0.0
    %445 = vmatpush1.msra.mxu0 0.0
    %446 = vmatprep.mubr.f32.mxu0 0.0
    %v447 = vand.u32 %v61, 4294901760
    %448 = vmatmul.mubr.f32.gmra.mrb[0].mxu0 %v447
    %v449 = vpop.f32.mrb[0].mxu0
    %v450 = vadd.f32 %v373, %v449
    %v451 = vpop.f32.mrb[0].mxu0
    %452 = vdwg.mxu0
    %453 = vmatprep.subr.mxu0 0.0
    %v454 = vand.u32 %v47, 4294901760
    %455 = vmatpush1.msra.mxu0 %v454
    %456 = vmatprep.subr.mxu0 0.0
    %v457 = vand.u32 %v65, 4294901760
    %458 = vmatpush1.msra.mxu0 %v457
    %459 = vmatprep.subr.mxu0 0.0
    %460 = vmatpush1.msra.mxu0 0.0
    %461 = vmatprep.subr.mxu0 0.0
    %462 = vmatpush1.msra.mxu0 0.0
    %463 = vmatprep.subr.mxu0 0.0
    %464 = vmatpush1.msra.mxu0 0.0
    %465 = vmatprep.subr.mxu0 0.0
    %466 = vmatpush1.msra.mxu0 0.0
    %467 = vmatprep.subr.mxu0 0.0
    %468 = vmatpush1.msra.mxu0 0.0
    %469 = vmatprep.subr.mxu0 0.0
    %470 = vmatpush1.msra.mxu0 0.0
    %471 = vmatprep.subr.mxu0 0.0
    %472 = vmatpush1.msra.mxu0 0.0
    %473 = vmatprep.subr.mxu0 0.0
    %474 = vmatpush1.msra.mxu0 0.0
    %475 = vmatprep.subr.mxu0 0.0
    %476 = vmatpush1.msra.mxu0 0.0
    %477 = vmatprep.subr.mxu0 0.0
    %478 = vmatpush1.msra.mxu0 0.0
    %479 = vmatprep.subr.mxu0 0.0
    %480 = vmatpush1.msra.mxu0 0.0
    %481 = vmatprep.subr.mxu0 0.0
    %482 = vmatpush1.msra.mxu0 0.0
    %483 = vmatprep.subr.mxu0 0.0
    %484 = vmatpush1.msra.mxu0 0.0
    %485 = vmatprep.subr.mxu0 0.0
    %486 = vmatpush1.msra.mxu0 0.0
    %487 = vmatprep.subr.mxu0 0.0
    %488 = vmatpush1.msra.mxu0 0.0
    %489 = vmatprep.subr.mxu0 0.0
    %490 = vmatpush1.msra.mxu0 0.0
    %491 = vmatprep.subr.mxu0 0.0
    %492 = vmatpush1.msra.mxu0 0.0
    %493 = vmatprep.subr.mxu0 0.0
    %494 = vmatpush1.msra.mxu0 0.0
    %495 = vmatprep.subr.mxu0 0.0
    %496 = vmatpush1.msra.mxu0 0.0
    %497 = vmatprep.subr.mxu0 0.0
    %498 = vmatpush1.msra.mxu0 0.0
    %499 = vmatprep.subr.mxu0 0.0
    %500 = vmatpush1.msra.mxu0 0.0
    %501 = vmatprep.subr.mxu0 0.0
    %502 = vmatpush1.msra.mxu0 0.0
    %503 = vmatprep.subr.mxu0 0.0
    %504 = vmatpush1.msra.mxu0 0.0
    %505 = vmatprep.subr.mxu0 0.0
    %506 = vmatpush1.msra.mxu0 0.0
    %507 = vmatprep.subr.mxu0 0.0
    %508 = vmatpush1.msra.mxu0 0.0
    %509 = vmatprep.subr.mxu0 0.0
    %510 = vmatpush1.msra.mxu0 0.0
    %511 = vmatprep.subr.mxu0 0.0
    %512 = vmatpush1.msra.mxu0 0.0
    %513 = vmatprep.subr.mxu0 0.0
    %514 = vmatpush1.msra.mxu0 0.0
    %515 = vmatprep.subr.mxu0 0.0
    %516 = vmatpush1.msra.mxu0 0.0
    %517 = vmatprep.subr.mxu0 0.0
    %518 = vmatpush1.msra.mxu0 0.0
    %519 = vmatprep.mubr.f32.mxu0 0.0
    %v520 = vand.u32 %v61, 4294901760
    %521 = vmatmul.mubr.f32.gmra.mrb[0].mxu0 %v520
    %v522 = vpop.f32.mrb[0].mxu0
    %v523 = vadd.f32 %v450, %v522
    %v524 = vpop.f32.mrb[0].mxu0
    %525 = vdwg.mxu0
    %v526 = vmax.f32 %v523, 0.0
    %v528 = vlaneseq
    %v529 = vshrl.u32 %v528, 7
    %v530 = vsub.s32 0, %v529
    %v531 = vrot.slane %v50, %v530
    %v533 = vmul.f32 %v526, %v531
    %vm534 = vcmask 408576
    %v535 = vsel %vm534, %v533, 0.0
    %536 = vadd.xlane.f32.xlu0 %v535
    %v537 = vpop.xlane.xlu0 %536
    %v538 = vstv %s51
    %v539 = vadd.f32 %v537, %v538
    %vm540 = vcmask 7168
    %541 = vst.msk [vmem:[%s5] sm:$0xff] %vm540, %v539
    // Predicated region
    $region30: #{tpu_custom_call.1} parent=1 // pred_check
      _
    $region31: #{tpu_custom_call.1} parent=1 // pred_check_branch
      %543 = sbr.rel (0) target = $region33
    $region32: #{tpu_custom_call.1} parent=1 // pred_region
      _
    $region33: #{tpu_custom_call.1} parent=1 // pred_fallthru
      _
    // Predicated region
    $region34: #{tpu_custom_call.1} parent=1 // pred_check
      _
    $region35: #{tpu_custom_call.1} parent=1 // pred_check_branch
      %545 = sbr.rel (0) target = $region37
    $region36: #{tpu_custom_call.1} parent=1 // pred_region
      _
    $region37: #{tpu_custom_call.1} parent=1 // pred_fallthru
      _
    %546 = vsyncpa [#allocation4], 1
    %547 = vsyncpa [#allocation6], 1

</llo_original>
